<compile_context>
chip_gen: v6e
topology: v6e:2x2x1
jax: 0.10.0
libtpu: 0.0.40
codegen_flags: <defaults>
</compile_context>

<pallas_src>
import functools

import jax
import jax.numpy as jnp
from jax.experimental import pallas as pl
from jax.experimental.pallas import tpu as pltpu

_LANE = 128
_SUBLANE = 8
_MiB = 1024 * 1024

# Scoped-VMEM ceiling for the streaming (pooling) kernels: safe on every
# generation (v5e/v6e 128 MiB physical, v7x 64 MiB) with headroom for Mosaic
# internal scratch.
_POOL_VMEM_LIMIT = 40 * _MiB
# Live-set budget used to size the double-buffered tiles (< the limit above).
_POOL_TILE_BUDGET = 28 * _MiB
# Row-tiled MLP: weights (~8.5 MiB bf16 at 2048x2048) + a few MiB of blocks.
_MLP_VMEM_LIMIT = 48 * _MiB


def _round_up(n, m):
    return ((n + m - 1) // m) * m


def _pick_tile_rows(rows, hw, in_itemsize, n_out_cols,
                    budget_bytes=_POOL_TILE_BUDGET):
    """Largest row tile (multiple of 8) whose padded, double-buffered live set
    (input block + output block) stays within `budget_bytes`.

    VMEM accounting per the (8,128) tiling rules:
      * the [tile_r, hw] input block is lane-padded to round_up(hw, 128),
      * a narrow (tile_r, n_out_cols) f32 output block is lane-padded to 128,
      * Pallas double-buffers each blocked operand (x2).
    """
    hw_pad = _round_up(hw, _LANE)
    in_bytes_per_row = hw_pad * in_itemsize
    out_bytes_per_row = _round_up(max(n_out_cols, 1), _LANE) * 4
    per_row = 2 * (in_bytes_per_row + out_bytes_per_row)     # both buffers
    tile_r = max(_SUBLANE, (budget_bytes // per_row) // _SUBLANE * _SUBLANE)
    return min(tile_r, _round_up(rows, _SUBLANE))


# ----------------------------------------------------------------------------
# Kernel 1: adaptive average pool (1,1)  ==  mean over the spatial (lane) axis
# ----------------------------------------------------------------------------
def _avgpool_kernel(x_ref, o_ref, *, inv_hw):
    x = x_ref[...].astype(jnp.float32)                       # [TILE_R, H*W]
    o_ref[...] = (jnp.sum(x, axis=-1, keepdims=True) * inv_hw).astype(o_ref.dtype)


def avgpool_2d(x_nchw):
    """AdaptiveAvgPool2d((1,1)) on NCHW input -> [B, C] float32."""
    B, C, H, W = x_nchw.shape
    rows, hw = B * C, H * W
    x2d = x_nchw.reshape(rows, hw)                            # free view
    tile_r = _pick_tile_rows(rows, hw, x2d.dtype.itemsize, n_out_cols=1)
    out = pl.pallas_call(
        functools.partial(_avgpool_kernel, inv_hw=1.0 / hw),
        out_shape=jax.ShapeDtypeStruct((rows, 1), jnp.float32),
        grid=(pl.cdiv(rows, tile_r),),
        in_specs=[pl.BlockSpec((tile_r, hw), lambda i: (i, 0))],
        out_specs=pl.BlockSpec((tile_r, 1), lambda i: (i, 0)),
        compiler_params=pltpu.CompilerParams(
            dimension_semantics=("parallel",),
            vmem_limit_bytes=_POOL_VMEM_LIMIT),
    )(x2d)
    return out.reshape(B, C)


# ----------------------------------------------------------------------------
# Kernel 2: region mean + complement (masked) mean, combined output
#   col 0: origin_mean = sum(x * (1-region_mask)) / (H*W - rH*rW)
#   col 1: mix_mean    = mean(x[:, :, sH:sH+rH, sW:sW+rW])
# The [1, H*W] region mask and the two reciprocal counts are precomputed on
# the host (tiny), so the per-tile body has no iota / compare / divide work.
# ----------------------------------------------------------------------------
def _region_kernel(inv_ref, mask_ref, x_ref, o_ref):
    # inv_ref (SMEM f32[2]) = [1/region_count, 1/complement_count]
    x = x_ref[...].astype(jnp.float32)                        # [TILE_R, H*W]
    m = mask_ref[...]                                         # [1, H*W]
    region_sum = jnp.sum(x * m, axis=-1, keepdims=True)
    total_sum = jnp.sum(x, axis=-1, keepdims=True)
    o_ref[:, 0:1] = ((total_sum - region_sum) * inv_ref[1]).astype(o_ref.dtype)
    o_ref[:, 1:2] = (region_sum * inv_ref[0]).astype(o_ref.dtype)


def region_features(x_nchw, start_h, start_w, height, width):
    """Returns the stacked feature [2B, C] = concat([origin_mean, mix_mean], 0)."""
    B, C, H, W = x_nchw.shape
    rows, hw = B * C, H * W
    x2d = x_nchw.reshape(rows, hw)

    row_idx = jnp.arange(H, dtype=jnp.int32)[:, None]
    col_idx = jnp.arange(W, dtype=jnp.int32)[None, :]
    in_region = ((row_idx >= start_h) & (row_idx < start_h + height)
                 & (col_idx >= start_w) & (col_idx < start_w + width))
    mask = in_region.astype(jnp.float32).reshape(1, hw)
    region_count = jnp.asarray(height * width, jnp.float32)
    # NOTE: a zero-area region or a region covering the whole map divides by
    # zero, exactly like the PyTorch reference.
    inv = jnp.stack([1.0 / region_count, 1.0 / (hw - region_count)])

    tile_r = _pick_tile_rows(rows, hw, x2d.dtype.itemsize, n_out_cols=2)
    out = pl.pallas_call(
        _region_kernel,
        out_shape=jax.ShapeDtypeStruct((rows, 2), jnp.float32),
        grid=(pl.cdiv(rows, tile_r),),
        in_specs=[pl.BlockSpec(memory_space=pltpu.MemorySpace.SMEM),
                  pl.BlockSpec((1, hw), lambda i: (0, 0)),
                  pl.BlockSpec((tile_r, hw), lambda i: (i, 0))],
        out_specs=pl.BlockSpec((tile_r, 2), lambda i: (i, 0)),
        compiler_params=pltpu.CompilerParams(
            dimension_semantics=("parallel",),
            vmem_limit_bytes=_POOL_VMEM_LIMIT),
    )(inv, mask, x2d)
    # [rows, 2] -> [2, B, C] -> [2B, C] (origin rows first, then mix rows);
    # a single tiny transpose replaces the previous two-slab concatenate.
    return jnp.transpose(out.reshape(B, C, 2), (2, 0, 1)).reshape(2 * B, C)


# ----------------------------------------------------------------------------
# Kernel 3: the MLP (Linear -> ReLU -> Linear), row-tiled.
# Weights/biases use a constant index_map so they stay VMEM-resident (bf16,
# f32 MXU accumulation) while row tiles are streamed and megacore-sharded.
# ----------------------------------------------------------------------------
def _mlp_kernel(feat_ref, w1_ref, b1_ref, w2_ref, b2_ref, o_ref):
    f = feat_ref[...].astype(w1_ref.dtype)
    h = jnp.dot(f, w1_ref[...], preferred_element_type=jnp.float32)
    h = jnp.maximum(h + b1_ref[...], 0.0)
    o = jnp.dot(h.astype(w2_ref.dtype), w2_ref[...],
                preferred_element_type=jnp.float32)
    o_ref[...] = (o + b2_ref[...]).astype(o_ref.dtype)


def mlp_apply(feat, w1, b1, w2, b2, *, tile_m=256):
    n, in_c = feat.shape
    hid = w1.shape[1]
    out_c = w2.shape[1]
    tile_m = min(tile_m, _round_up(max(n, _SUBLANE), _SUBLANE))
    n_pad = _round_up(n, tile_m)
    if n_pad != n:
        feat = jnp.pad(feat, ((0, n_pad - n), (0, 0)))

    def resident(i):            # weights / biases: same block every step
        return (0, 0)

    out = pl.pallas_call(
        _mlp_kernel,
        out_shape=jax.ShapeDtypeStruct((n_pad, out_c), jnp.float32),
        grid=(n_pad // tile_m,),
        in_specs=[pl.BlockSpec((tile_m, in_c), lambda i: (i, 0)),
                  pl.BlockSpec((in_c, hid), resident),
                  pl.BlockSpec((1, hid), resident),
                  pl.BlockSpec((hid, out_c), resident),
                  pl.BlockSpec((1, out_c), resident)],
        out_specs=pl.BlockSpec((tile_m, out_c), lambda i: (i, 0)),
        compiler_params=pltpu.CompilerParams(
            dimension_semantics=("parallel",),
            vmem_limit_bytes=_MLP_VMEM_LIMIT),
    )(feat, w1, b1, w2, b2)
    return out[:n]


# ----------------------------------------------------------------------------
# Module wrapper
# ----------------------------------------------------------------------------
class RegionCLNonLinearNeckV1:
    """MoCo-v2 neck (avgpool -> fc -> relu -> fc) + RegionCL region branch."""

    def __init__(self, in_channels, hid_channels, out_channels,
                 with_avg_pool=True, key=None, std=0.01,
                 weight_dtype=jnp.bfloat16):
        self.with_avg_pool = with_avg_pool
        key = jax.random.PRNGKey(0) if key is None else key
        k1, k2 = jax.random.split(key)
        # PyTorch nn.Linear weight is [out, in]; init_weights('normal') -> N(0, std),
        # bias 0.  Stored pre-transposed [in, out]; weights in bf16 (f32 MXU
        # accumulation), biases in f32.
        w1 = std * jax.random.normal(k1, (hid_channels, in_channels), jnp.float32)
        w2 = std * jax.random.normal(k2, (out_channels, hid_channels), jnp.float32)
        self.w1 = w1.T.astype(weight_dtype)
        self.b1 = jnp.zeros((1, hid_channels), jnp.float32)
        self.w2 = w2.T.astype(weight_dtype)
        self.b2 = jnp.zeros((1, out_channels), jnp.float32)

    def _mlp(self, feat):
        return mlp_apply(feat, self.w1, self.b1, self.w2, self.b2)

    def __call__(self, x, randStartW=None, randStartH=None, randWidth=None,
                 randHeight=None, randperm=None, unShuffle=None):
        assert len(x) == 1
        x = x[0]                                          # [B, C, H, W]
        if randStartW is None:
            if self.with_avg_pool:
                feat = avgpool_2d(x)                      # [B, C]
            else:
                feat = x.reshape(x.shape[0], -1)
            return self._mlp(feat)
        else:
            if randHeight is None:
                randHeight = randWidth
            feature = region_features(x, randStartH, randStartW,
                                      randHeight, randWidth)      # [2B, C]
            out = self._mlp(feature)
            B = x.shape[0]
            origin_mean, mix_mean_shuffle = out[:B], out[B:]
            # TODO(synk): the randperm/unShuffle row gathers stay as tiny jnp
            # gathers on [B, out] — no dedicated Pallas kernel is warranted.
            origin_mean_shuffle = origin_mean[randperm]
            mix_mean = mix_mean_shuffle[unShuffle]
            return origin_mean, origin_mean_shuffle, mix_mean, mix_mean_shuffle


# ----------------------------------------------------------------------------
# Reference (plain jnp) mirroring the kernels' bf16 weight / f32-acc numerics
# ----------------------------------------------------------------------------
def _ref_forward(neck, x, sW=None, sH=None, rW=None, rH=None, perm=None, unshuf=None):
    w1 = neck.w1.astype(jnp.float32)
    w2 = neck.w2.astype(jnp.float32)

    def mlp(f):
        f = f.astype(neck.w1.dtype).astype(jnp.float32)
        h = jnp.maximum(f @ w1 + neck.b1, 0.0)
        h = h.astype(neck.w2.dtype).astype(jnp.float32)
        return h @ w2 + neck.b2

    if sW is None:
        return mlp(jnp.mean(x, axis=(2, 3)))
    if rH is None:
        rH = rW
    mix = jnp.mean(x[:, :, sH:sH + rH, sW:sW + rW], axis=(2, 3))
    mask = jnp.ones_like(x).at[:, :, sH:sH + rH, sW:sW + rW].set(0.0)
    origin = jnp.sum(x * mask, axis=(2, 3)) / jnp.sum(mask, axis=(2, 3))
    out = mlp(jnp.concatenate([origin, mix], axis=0))
    B = x.shape[0]
    o, m = out[:B], out[B:]
    return o, o[perm], m[unshuf], m


if __name__ == "__main__":
    B, C, H, W = 2, 32, 16, 16
    hid, out_c = 64, 16

    key = jax.random.PRNGKey(0)
    kx, kp = jax.random.split(key)
    x = jax.random.normal(kx, (B, C, H, W), dtype=jnp.float32)

    neck = RegionCLNonLinearNeckV1(C, hid, out_c, with_avg_pool=True,
                                   key=jax.random.PRNGKey(0))

    # ---- path 1: plain avgpool + mlp ----
    y = neck([x])
    y = jax.block_until_ready(y)
    y_ref = _ref_forward(neck, x)
    assert y.shape == (B, out_c)
    assert jnp.allclose(y, y_ref, atol=1e-4), "avgpool+mlp mismatch"

    # ---- path 2: region branch ----
    sH, sW, rH, rW = 3, 5, 7, 6
    randperm = jax.random.permutation(kp, B)
    unShuffle = jnp.argsort(randperm)
    o_m, o_ms, m_m, m_ms = neck([x], randStartW=sW, randStartH=sH,
                                randWidth=rW, randHeight=rH,
                                randperm=randperm, unShuffle=unShuffle)
    jax.block_until_ready((o_m, o_ms, m_m, m_ms))
    r0, r1, r2, r3 = _ref_forward(neck, x, sW, sH, rW, rH, randperm, unShuffle)
    for a, b in zip((o_m, o_ms, m_m, m_ms), (r0, r1, r2, r3)):
        assert a.shape == (B, out_c)
        assert jnp.allclose(a, b, atol=1e-4), "region branch mismatch"

    print("KERNEL_OK")
</pallas_src>

<mosaic_0001>
module attributes {stable_mosaic.version = 11 : i64} {
  func.func @_avgpool_kernel(%arg0: i32, %arg1: memref<64x256xf32, #tpu.memory_space<vmem>>, %arg2: memref<64x1xf32, #tpu.memory_space<vmem>>) attributes {dimension_semantics = [#tpu.dimension_semantics<parallel>], iteration_bounds = array<i64: 1>, scalar_prefetch = 0 : i64, scratch_operands = 0 : i64, tpu.core_type = #tpu.core_type<tc>, window_params = [{transform_indices = @transform_0, window_bounds = array<i64: 64, 256>}, {transform_indices = @transform_1, window_bounds = array<i64: 64, 1>}]} {
    %c0 = arith.constant 0 : index
    %c0_0 = arith.constant 0 : index
    %0 = vector.load %arg1[%c0, %c0_0] : memref<64x256xf32, #tpu.memory_space<vmem>>, vector<64x256xf32>
    %cst = arith.constant dense<0.000000e+00> : vector<64xf32>
    %1 = vector.multi_reduction <add>, %0, %cst [1] : vector<64x256xf32> to vector<64xf32>
    %2 = vector.shape_cast %1 : vector<64xf32> to vector<64x1xf32>
    %cst_1 = arith.constant 3.906250e-03 : f32
    %3 = vector.broadcast %cst_1 : f32 to vector<64x1xf32>
    %4 = arith.mulf %2, %3 : vector<64x1xf32>
    %c0_2 = arith.constant 0 : index
    %c0_3 = arith.constant 0 : index
    %5 = vector.load %arg2[%c0_2, %c0_3] : memref<64x1xf32, #tpu.memory_space<vmem>>, vector<64x1xf32>
    tpu.vector_store %arg2[%c0_2, %c0_3], %4 {strides = array<i32>} : memref<64x1xf32, #tpu.memory_space<vmem>>, vector<64x1xf32>,
    return
  }
  func.func @transform_0(%arg0: i32) -> (i32, i32) {
    %c0_i32 = arith.constant 0 : i32
    %c0_i32_0 = arith.constant 0 : i32
    return %arg0, %c0_i32 : i32, i32
  }
  func.func @transform_1(%arg0: i32) -> (i32, i32) {
    %c0_i32 = arith.constant 0 : i32
    %c0_i32_0 = arith.constant 0 : i32
    return %arg0, %c0_i32 : i32, i32
  }
}

</mosaic_0001>

<llo_original>
// kernel: tpu_custom_call.1
$region0: #{tpu_custom_call.1}
  #allocation0 [shape = 'u32[]', space=smem, size = 0x4, offset = 0x4, fixed_abs, tag = 'smem constant byte address 0x4 - core index']
  #allocation1 [shape = 'u32[144,128]{1,0:T(1,128)}', space=vmem, size = 0x12000, scoped, tag = 'internal scratch']
  %s0 = inlined_call_operand.hbm [shape: f32[64,256], index: 0, kind: input, shape index: {}]
  %s1 = inlined_call_operand.vmem [shape: f32[64,1], index: 1, kind: output, shape index: {}]
  %s2 = sld [smem:[#allocation0]]
  $region18: #{tpu_custom_call.1} parent=0
    _
  %s4 = ssub.s32 1, %s2
  %s5 = scalar_select 0, %s4, %s2
  $region1: #{tpu_custom_call.1} parent=0
    #allocation2 [shape = 'u8[65536]{0}', space=vmem, size = 0x10000, scoped, tag = 'input window, operand 0, single buffered']
    #allocation3 [shape = 's32[1]{0}', space=sflag, size = 0x4, scoped, tag = 'scoped memory for tpu_custom_call.1']
    %6 = vsyncpa [#allocation3], 0
    // Predicated region
    $region2: #{tpu_custom_call.1} parent=1 // pred_check
      _
    $region3: #{tpu_custom_call.1} parent=1 // pred_check_branch
      %8 = sbr.rel (0) target = $region5
    $region4: #{tpu_custom_call.1} parent=1 // pred_region
      %s10 = ssub.s32 2048, 2048
      %11 = vsyncadd [#allocation3], %s10
      %s12 = sshll.u32 [#allocation2], 4
      %s13 = int_to_ptr.vmem [resolvable:$true] %s12
      %18 = dma.hbm_to_vmem [thread:$0]  %s0, 2048, %s13, [#allocation3], 256, 256, 16
    $region5: #{tpu_custom_call.1} parent=1 // pred_fallthru
      _
    // Predicated region
    $region6: #{tpu_custom_call.1} parent=1 // pred_check
      _
    $region7: #{tpu_custom_call.1} parent=1 // pred_check_branch
      %20 = sbr.rel (0) target = $region9
    $region8: #{tpu_custom_call.1} parent=1 // pred_region
      %21 = dma.done [#allocation3], 2048
    $region9: #{tpu_custom_call.1} parent=1 // pred_fallthru
      _
    %v22 = vld [vmem:[#allocation2] sm:$0xff]
    %v23 = vld [vmem:[#allocation2 + $0x8] sm:$0xff]
    %v24 = vld [vmem:[#allocation2 + $0x10] sm:$0xff]
    %v25 = vld [vmem:[#allocation2 + $0x18] sm:$0xff]
    %v26 = vld [vmem:[#allocation2 + $0x20] sm:$0xff]
    %v27 = vld [vmem:[#allocation2 + $0x28] sm:$0xff]
    %v28 = vld [vmem:[#allocation2 + $0x30] sm:$0xff]
    %v29 = vld [vmem:[#allocation2 + $0x38] sm:$0xff]
    %v30 = vld [vmem:[#allocation2 + $0x40] sm:$0xff]
    %v31 = vld [vmem:[#allocation2 + $0x48] sm:$0xff]
    %v32 = vld [vmem:[#allocation2 + $0x50] sm:$0xff]
    %v33 = vld [vmem:[#allocation2 + $0x58] sm:$0xff]
    %v34 = vld [vmem:[#allocation2 + $0x60] sm:$0xff]
    %v35 = vld [vmem:[#allocation2 + $0x68] sm:$0xff]
    %v36 = vld [vmem:[#allocation2 + $0x70] sm:$0xff]
    %v37 = vld [vmem:[#allocation2 + $0x78] sm:$0xff]
    %v38 = vadd.f32 %v22, %v23
    %39 = vadd.xlane.f32.xlu0 %v38
    %v40 = vpop.xlane.xlu0 %39
    %v41 = vadd.f32 %v24, %v25
    %42 = vadd.xlane.f32.xlu0 %v41
    %v43 = vpop.xlane.xlu0 %42
    %v44 = vadd.f32 %v26, %v27
    %45 = vadd.xlane.f32.xlu0 %v44
    %v46 = vpop.xlane.xlu0 %45
    %v47 = vadd.f32 %v28, %v29
    %48 = vadd.xlane.f32.xlu0 %v47
    %v49 = vpop.xlane.xlu0 %48
    %v50 = vadd.f32 %v30, %v31
    %51 = vadd.xlane.f32.xlu0 %v50
    %v52 = vpop.xlane.xlu0 %51
    %v53 = vadd.f32 %v32, %v33
    %54 = vadd.xlane.f32.xlu0 %v53
    %v55 = vpop.xlane.xlu0 %54
    %v56 = vadd.f32 %v34, %v35
    %57 = vadd.xlane.f32.xlu0 %v56
    %v58 = vpop.xlane.xlu0 %57
    %v59 = vadd.f32 %v36, %v37
    %60 = vadd.xlane.f32.xlu0 %v59
    %v61 = vpop.xlane.xlu0 %60
    %v62 = vmul.f32 %v40, 0.00390625
    %v63 = vmul.f32 %v43, 0.00390625
    %v64 = vmul.f32 %v46, 0.00390625
    %v65 = vmul.f32 %v49, 0.00390625
    %v66 = vmul.f32 %v52, 0.00390625
    %v67 = vmul.f32 %v55, 0.00390625
    %v68 = vmul.f32 %v58, 0.00390625
    %v69 = vmul.f32 %v61, 0.00390625
    %vm70 = vcmask 7168
    %71 = vst.msk [vmem:[%s1] sm:$0xff] %vm70, %v62
    %72 = vst.msk [vmem:[%s1 + $0x8] sm:$0xff] %vm70, %v63
    %73 = vst.msk [vmem:[%s1 + $0x10] sm:$0xff] %vm70, %v64
    %74 = vst.msk [vmem:[%s1 + $0x18] sm:$0xff] %vm70, %v65
    %75 = vst.msk [vmem:[%s1 + $0x20] sm:$0xff] %vm70, %v66
    %76 = vst.msk [vmem:[%s1 + $0x28] sm:$0xff] %vm70, %v67
    %77 = vst.msk [vmem:[%s1 + $0x30] sm:$0xff] %vm70, %v68
    %78 = vst.msk [vmem:[%s1 + $0x38] sm:$0xff] %vm70, %v69
    // Predicated region
    $region10: #{tpu_custom_call.1} parent=1 // pred_check
      _
    $region11: #{tpu_custom_call.1} parent=1 // pred_check_branch
      %80 = sbr.rel (0) target = $region13
    $region12: #{tpu_custom_call.1} parent=1 // pred_region
      _
    $region13: #{tpu_custom_call.1} parent=1 // pred_fallthru
      _
    // Predicated region
    $region14: #{tpu_custom_call.1} parent=1 // pred_check
      _
    $region15: #{tpu_custom_call.1} parent=1 // pred_check_branch
      %82 = sbr.rel (0) target = $region17
    $region16: #{tpu_custom_call.1} parent=1 // pred_region
      _
    $region17: #{tpu_custom_call.1} parent=1 // pred_fallthru
      _
    %83 = vsyncpa [#allocation3], 1

</llo_original>
